<compile_context>
chip_gen: v5e
topology: v5e:2x2
jax: 0.10.0
libtpu: 0.0.40
codegen_flags: <defaults>
</compile_context>

<pallas_src>
import math
from typing import NamedTuple

import jax
import jax.numpy as jnp
from jax.experimental import pallas as pl
from jax.experimental.pallas import tpu as pltpu


def _round_up(x, m):
    return ((x + m - 1) // m) * m


def _cdiv(a, b):
    return -(-a // b)


def _vmem_capacity_bytes():
    """Per-TensorCore physical VMEM, with conservative fallbacks."""
    try:
        info = pltpu.get_tpu_info()
        for attr in ("vmem_capacity_bytes", "vmem_size_bytes", "vmem_bytes"):
            v = getattr(info, attr, None)
            if v:
                return int(v)
    except Exception:
        pass
    try:
        kind = jax.devices()[0].device_kind.lower()
    except Exception:
        kind = ""
    if "v5" in kind or "v6" in kind:
        return 128 * 1024 * 1024
    return 64 * 1024 * 1024  # v7x per-TC, and a safe default for unknown chips


class FFNParams(NamedTuple):
    """Padded / pre-cast FeedForward parameters (built once via prepare_params)."""
    w1: jax.Array      # (d_model_p, d_ff_p)  compute dtype, (in, out) layout
    b1: jax.Array      # (1, d_ff_p)          float32
    w2: jax.Array      # (d_ff_p, d_model_p)  compute dtype
    b2: jax.Array      # (1, d_model_p)       float32
    d_model: int
    d_ff: int


def prepare_params(w1, b1, w2, b2, compute_dtype=jnp.bfloat16):
    """Pad feature dims to 128-lane multiples and cast to the MXU dtype, ONCE.

    w1/w2 are stored (in, out), i.e. already transposed vs nn.Linear's (out, in).
    Doing this at init removes a per-call HBM copy+cast of both weight matrices.
    Zero padding is exact: padded d_ff columns give relu(0+0)=0 and contribute
    nothing; padded d_model rows/cols are sliced off by the wrapper.
    """
    d_model, d_ff = w1.shape
    d_model_p = _round_up(d_model, 128)
    d_ff_p = _round_up(d_ff, 128)
    if (d_model_p, d_ff_p) == (d_model, d_ff) and w1.dtype == compute_dtype:
        w1_p, w2_p = w1, w2
    else:
        w1_p = jnp.zeros((d_model_p, d_ff_p), compute_dtype).at[:d_model, :d_ff].set(
            w1.astype(compute_dtype))
        w2_p = jnp.zeros((d_ff_p, d_model_p), compute_dtype).at[:d_ff, :d_model].set(
            w2.astype(compute_dtype))
    b1_p = jnp.zeros((1, d_ff_p), jnp.float32).at[0, :d_ff].set(b1.astype(jnp.float32))
    b2_p = jnp.zeros((1, d_model_p), jnp.float32).at[0, :d_model].set(
        b2.astype(jnp.float32))
    return FFNParams(w1_p, b1_p, w2_p, b2_p, d_model, d_ff)


# ------------------------------ kernels -----------------------------------------


def _make_resident_kernel(d_ff_p, tf_inner):
    """Weights fully resident in VMEM (constant index_maps -> DMA'd once).

    The d_ff contraction is chunked with static ref slices so the live (TM, chunk)
    intermediate stays small; chunk offsets are 128-multiples (aligned views).
    """
    starts = list(range(0, d_ff_p, tf_inner))
    chunks = [(s, min(tf_inner, d_ff_p - s)) for s in starts]

    def kernel(x_ref, w1_ref, b1_ref, w2_ref, b2_ref, o_ref):
        x = x_ref[...]
        acc = None
        for start, size in chunks:                       # static, unrolled
            h = jnp.dot(x, w1_ref[:, start:start + size],
                        preferred_element_type=jnp.float32)
            h = jnp.maximum(h + b1_ref[:, start:start + size], 0.0)  # bias+ReLU, f32
            # Dropout (eval mode) == identity.
            p = jnp.dot(h.astype(w2_ref.dtype), w2_ref[start:start + size, :],
                        preferred_element_type=jnp.float32)
            acc = p if acc is None else acc + p
        o_ref[...] = (acc + b2_ref[...]).astype(o_ref.dtype)

    return kernel


def _tiled_kernel(x_ref, w1_ref, b1_ref, w2_ref, b2_ref, o_ref, acc_ref):
    """One (token tile i, d_ff tile f) step; f is the LAST (reduction) grid axis.

    Wrapper guarantees num_programs(1) >= 2.  The first step writes the accumulator
    and the last step fuses its partial product directly into the output store.
    """
    f = pl.program_id(1)
    last = pl.num_programs(1) - 1

    h = jnp.dot(x_ref[...], w1_ref[...], preferred_element_type=jnp.float32)
    h = jnp.maximum(h + b1_ref[...], 0.0)
    # Dropout (eval mode) == identity.
    partial = jnp.dot(h.astype(w2_ref.dtype), w2_ref[...],
                      preferred_element_type=jnp.float32)

    @pl.when(f == 0)
    def _first():
        acc_ref[...] = partial

    @pl.when(jnp.logical_and(f > 0, f < last))
    def _middle():
        acc_ref[...] += partial

    @pl.when(f == last)
    def _last():
        o_ref[...] = (acc_ref[...] + partial + b2_ref[...]).astype(o_ref.dtype)


# ------------------------------ VMEM accounting ---------------------------------


def _resident_vmem_bytes(tm, d_model_p, d_ff_p, tf_inner, out_bytes):
    w = 2 * 2 * (d_model_p * d_ff_p * 2)            # W1+W2 bf16, 2 pipeline buffers
    xb = 2 * tm * d_model_p * 2                     # x tile, double-buffered
    ob = 2 * tm * d_model_p * out_bytes             # out tile, double-buffered
    bias = 2 * 4 * (d_ff_p + d_model_p)
    acc = tm * d_model_p * 4                        # f32 accumulator value
    h = tm * min(tf_inner, d_ff_p) * (4 + 2)        # f32 chunk + bf16 recast
    return w + xb + ob + bias + acc + h


def _tiled_vmem_bytes(tm, tf, d_model_p, out_bytes):
    w = 2 * 2 * (d_model_p * tf * 2)                # W1/W2 tiles, double-buffered
    xb = 2 * tm * d_model_p * 2
    ob = 2 * tm * d_model_p * out_bytes
    bias = 2 * 4 * (tf + d_model_p)
    acc = tm * d_model_p * 4                        # VMEM scratch accumulator
    h = tm * tf * (4 + 2)
    return w + xb + ob + bias + acc + h


def _divisor_tiles(total, unit=128):
    m = total // unit
    return [d * unit for d in range(m, 0, -1) if m % d == 0]


# ------------------------------ wrapper ------------------------------------------


def feed_forward(x, params: FFNParams, *, tm_target=1024, tf_inner=512,
                 force_tiled=False):
    """relu(x @ W1 + b1) @ W2 + b2 (dropout = eval-mode identity).

    x: (..., d_model).  params from prepare_params().  Output keeps x.dtype.
    """
    compute_dtype = params.w1.dtype
    d_model, d_ff = params.d_model, params.d_ff
    d_model_p, d_ff_p = params.w1.shape
    out_dtype = x.dtype
    out_bytes = jnp.dtype(out_dtype).itemsize

    lead = x.shape[:-1]
    assert x.shape[-1] == d_model, "last dim of x must be d_model"
    T = 1
    for s in lead:
        T *= s
    x2 = x.reshape(T, d_model)

    # --- generation-aware VMEM budget --------------------------------------------
    capacity = _vmem_capacity_bytes()
    vmem_limit = int(capacity * 0.85)          # headroom for compiler-internal scratch
    budget = vmem_limit - (4 << 20)

    # --- roofline-sized, balanced, 16-row-aligned token tile ----------------------
    n_t = max(1, _cdiv(T, tm_target))
    tm = _round_up(_cdiv(T, n_t), 16)

    # --- choose path --------------------------------------------------------------
    fits_resident = _resident_vmem_bytes(tm, d_model_p, d_ff_p, tf_inner,
                                         out_bytes) <= budget
    can_split_ff = d_ff_p >= 256
    use_resident = fits_resident and not (force_tiled and can_split_ff)
    if not use_resident and not can_split_ff:
        if not fits_resident:
            raise ValueError("FeedForward does not fit the VMEM budget")
        use_resident = True

    if use_resident:
        tf = d_ff_p
    else:
        # Shrink TF first (keeps arithmetic intensity == TM), only then TM.
        tf_candidates = [t for t in _divisor_tiles(d_ff_p)
                         if t <= max(128, d_ff_p // 2)]
        tm_cur, choice = tm, None
        while choice is None:
            for t in tf_candidates:
                if _tiled_vmem_bytes(tm_cur, t, d_model_p, out_bytes) <= budget:
                    choice = (tm_cur, t)
                    break
            if choice is None:
                if tm_cur <= 16:
                    raise ValueError("FeedForward tiles do not fit the VMEM budget")
                tm_cur = max(16, _round_up(tm_cur // 2, 16))
        tm, tf = choice

    T_p = _round_up(T, tm)
    n_t = T_p // tm

    # --- pad / cast x only when needed -------------------------------------------
    if (T_p, d_model_p) != (T, d_model):
        x_p = jnp.zeros((T_p, d_model_p), compute_dtype).at[:T, :d_model].set(
            x2.astype(compute_dtype))
    elif x2.dtype != compute_dtype:
        x_p = x2.astype(compute_dtype)
    else:
        x_p = x2

    cparams = pltpu.CompilerParams(
        dimension_semantics=("parallel",) if use_resident else ("parallel", "arbitrary"),
        vmem_limit_bytes=vmem_limit,
    )

    if use_resident:
        # Weights held resident in VMEM: constant index_maps => fetched from HBM once
        # (per TensorCore on v7x megacore), never re-streamed per token tile.
        kernel = _make_resident_kernel(d_ff_p, tf_inner)
        out_p = pl.pallas_call(
            kernel,
            out_shape=jax.ShapeDtypeStruct((T_p, d_model_p), out_dtype),
            grid_spec=pltpu.PrefetchScalarGridSpec(
                num_scalar_prefetch=0,
                grid=(n_t,),
                in_specs=[
                    pl.BlockSpec((tm, d_model_p), lambda i: (i, 0)),        # x tile
                    pl.BlockSpec((d_model_p, d_ff_p), lambda i: (0, 0)),    # W1 resident
                    pl.BlockSpec((1, d_ff_p), lambda i: (0, 0)),            # b1 resident
                    pl.BlockSpec((d_ff_p, d_model_p), lambda i: (0, 0)),    # W2 resident
                    pl.BlockSpec((1, d_model_p), lambda i: (0, 0)),         # b2 resident
                ],
                out_specs=pl.BlockSpec((tm, d_model_p), lambda i: (i, 0)),
            ),
            compiler_params=cparams,
        )(x_p, params.w1, params.b1, params.w2, params.b2)
    else:
        n_f = d_ff_p // tf
        assert n_f >= 2
        out_p = pl.pallas_call(
            _tiled_kernel,
            out_shape=jax.ShapeDtypeStruct((T_p, d_model_p), out_dtype),
            grid_spec=pltpu.PrefetchScalarGridSpec(
                num_scalar_prefetch=0,
                grid=(n_t, n_f),                                 # reduction axis LAST
                in_specs=[
                    pl.BlockSpec((tm, d_model_p), lambda i, f: (i, 0)),   # x tile
                    pl.BlockSpec((d_model_p, tf), lambda i, f: (0, f)),   # W1 tile
                    pl.BlockSpec((1, tf), lambda i, f: (0, f)),           # b1 tile
                    pl.BlockSpec((tf, d_model_p), lambda i, f: (f, 0)),   # W2 tile
                    pl.BlockSpec((1, d_model_p), lambda i, f: (0, 0)),    # b2
                ],
                out_specs=pl.BlockSpec((tm, d_model_p), lambda i, f: (i, 0)),
                scratch_shapes=[pltpu.VMEM((tm, d_model_p), jnp.float32)],
            ),
            compiler_params=cparams,
        )(x_p, params.w1, params.b1, params.w2, params.b2)

    out = out_p
    if (T_p, d_model_p) != (T, d_model):
        out = out[:T, :d_model]
    return out.reshape(*lead, d_model)


def init_params(key, d_model, d_ff, dtype=jnp.float32):
    """Deterministic init mirroring nn.Linear's uniform(-1/sqrt(fan_in), ...)."""
    k1, k2, k3, k4 = jax.random.split(key, 4)
    lim1 = 1.0 / math.sqrt(d_model)
    lim2 = 1.0 / math.sqrt(d_ff)
    # Stored already transposed as (in, out).
    w1 = jax.random.uniform(k1, (d_model, d_ff), dtype, -lim1, lim1)
    b1 = jax.random.uniform(k2, (d_ff,), dtype, -lim1, lim1)
    w2 = jax.random.uniform(k3, (d_ff, d_model), dtype, -lim2, lim2)
    b2 = jax.random.uniform(k4, (d_model,), dtype, -lim2, lim2)
    return w1, b1, w2, b2


if __name__ == "__main__":
    batch, seq, d_model, d_ff = 2, 8, 32, 64

    key = jax.random.PRNGKey(0)
    kx, kp, kp2 = jax.random.split(key, 3)
    x = jax.random.normal(kx, (batch, seq, d_model), jnp.float32)
    x2d = x.reshape(-1, d_model)

    def bf16_ref(w1_, b1_, w2_, b2_):
        xb = x2d.astype(jnp.bfloat16)
        hb = jnp.maximum(jnp.dot(xb, w1_.astype(jnp.bfloat16),
                                 preferred_element_type=jnp.float32) + b1_, 0.0)
        return (jnp.dot(hb.astype(jnp.bfloat16), w2_.astype(jnp.bfloat16),
                        preferred_element_type=jnp.float32) + b2_
                ).reshape(batch, seq, d_model)

    # --- case 1: resident-weights fast path ---------------------------------------
    w1, b1, w2, b2 = init_params(kp, d_model, d_ff)
    params = prepare_params(w1, b1, w2, b2)
    out = feed_forward(x, params)
    jax.block_until_ready(out)

    ref1 = bf16_ref(w1, b1, w2, b2)
    assert jnp.allclose(out, ref1, atol=2e-3, rtol=2e-3), "resident: mismatch vs bf16 ref"
    ref1_f32 = (jnp.maximum(x2d @ w1 + b1, 0.0) @ w2 + b2).reshape(batch, seq, d_model)
    assert jnp.allclose(out, ref1_f32, atol=5e-2, rtol=5e-2), "resident: mismatch vs f32 ref"

    # --- case 2: tiled fallback path (forced at small size to exercise it) --------
    d_ff2 = 256
    w1t, b1t, w2t, b2t = init_params(kp2, d_model, d_ff2)
    params2 = prepare_params(w1t, b1t, w2t, b2t)
    out2 = feed_forward(x, params2, force_tiled=True)
    jax.block_until_ready(out2)

    ref2 = bf16_ref(w1t, b1t, w2t, b2t)
    assert jnp.allclose(out2, ref2, atol=2e-3, rtol=2e-3), "tiled: mismatch vs bf16 ref"
    ref2_f32 = (jnp.maximum(x2d @ w1t + b1t, 0.0) @ w2t + b2t
                ).reshape(batch, seq, d_model)
    assert jnp.allclose(out2, ref2_f32, atol=5e-2, rtol=5e-2), "tiled: mismatch vs f32 ref"

    print("KERNEL_OK")
</pallas_src>

<mosaic_0001>
module attributes {stable_mosaic.version = 11 : i64} {
  func.func @kernel(%arg0: i32, %arg1: memref<16x128xbf16, #tpu.memory_space<vmem>>, %arg2: memref<128x128xbf16, #tpu.memory_space<vmem>>, %arg3: memref<1x128xf32, #tpu.memory_space<vmem>>, %arg4: memref<128x128xbf16, #tpu.memory_space<vmem>>, %arg5: memref<1x128xf32, #tpu.memory_space<vmem>>, %arg6: memref<16x128xf32, #tpu.memory_space<vmem>>) attributes {dimension_semantics = [#tpu.dimension_semantics<parallel>], iteration_bounds = array<i64: 1>, scalar_prefetch = 0 : i64, scratch_operands = 0 : i64, tpu.core_type = #tpu.core_type<tc>, window_params = [{transform_indices = @transform_0, window_bounds = array<i64: 16, 128>}, {pipeline_mode = #tpu.pipeline_mode<synchronous>, transform_indices = @transform_1, window_bounds = array<i64: 128, 128>}, {pipeline_mode = #tpu.pipeline_mode<synchronous>, transform_indices = @transform_2, window_bounds = array<i64: 1, 128>}, {pipeline_mode = #tpu.pipeline_mode<synchronous>, transform_indices = @transform_3, window_bounds = array<i64: 128, 128>}, {pipeline_mode = #tpu.pipeline_mode<synchronous>, transform_indices = @transform_4, window_bounds = array<i64: 1, 128>}, {transform_indices = @transform_5, window_bounds = array<i64: 16, 128>}]} {
    %c0 = arith.constant 0 : index
    %c0_0 = arith.constant 0 : index
    %0 = vector.load %arg1[%c0, %c0_0] : memref<16x128xbf16, #tpu.memory_space<vmem>>, vector<16x128xbf16>
    %c0_1 = arith.constant 0 : index
    %c0_2 = arith.constant 0 : index
    %1 = vector.load %arg2[%c0_1, %c0_2] : memref<128x128xbf16, #tpu.memory_space<vmem>>, vector<128x128xbf16>
    %cst = arith.constant dense<0.000000e+00> : vector<16x128xf32>
    %2 = tpu.matmul %0, %1, %cst {dimension_numbers = #tpu.dot_dimension_numbers<[1], [0], [0], [1], [0, 0, 1, 1], [], []>} : vector<16x128xbf16>, vector<128x128xbf16>, vector<16x128xf32> -> vector<16x128xf32>
    %c0_3 = arith.constant 0 : index
    %c0_4 = arith.constant 0 : index
    %3 = vector.load %arg3[%c0_3, %c0_4] : memref<1x128xf32, #tpu.memory_space<vmem>>, vector<1x128xf32>
    %4 = vector.broadcast %3 : vector<1x128xf32> to vector<16x128xf32>
    %5 = arith.addf %2, %4 : vector<16x128xf32>
    %cst_5 = arith.constant 0.000000e+00 : f32
    %6 = vector.broadcast %cst_5 : f32 to vector<16x128xf32>
    %7 = arith.maximumf %5, %6 : vector<16x128xf32>
    %8 = arith.truncf %7 : vector<16x128xf32> to vector<16x128xbf16>
    %c0_6 = arith.constant 0 : index
    %c0_7 = arith.constant 0 : index
    %9 = vector.load %arg4[%c0_6, %c0_7] : memref<128x128xbf16, #tpu.memory_space<vmem>>, vector<128x128xbf16>
    %cst_8 = arith.constant dense<0.000000e+00> : vector<16x128xf32>
    %10 = tpu.matmul %8, %9, %cst_8 {dimension_numbers = #tpu.dot_dimension_numbers<[1], [0], [0], [1], [0, 0, 1, 1], [], []>} : vector<16x128xbf16>, vector<128x128xbf16>, vector<16x128xf32> -> vector<16x128xf32>
    %c0_9 = arith.constant 0 : index
    %c0_10 = arith.constant 0 : index
    %11 = vector.load %arg5[%c0_9, %c0_10] : memref<1x128xf32, #tpu.memory_space<vmem>>, vector<1x128xf32>
    %12 = vector.broadcast %11 : vector<1x128xf32> to vector<16x128xf32>
    %13 = arith.addf %10, %12 : vector<16x128xf32>
    %c0_11 = arith.constant 0 : index
    %c0_12 = arith.constant 0 : index
    %14 = vector.load %arg6[%c0_11, %c0_12] : memref<16x128xf32, #tpu.memory_space<vmem>>, vector<16x128xf32>
    tpu.vector_store %arg6[%c0_11, %c0_12], %13 {strides = array<i32>} : memref<16x128xf32, #tpu.memory_space<vmem>>, vector<16x128xf32>,
    return
  }
  func.func @transform_0(%arg0: i32) -> (i32, i32) {
    %c0_i32 = arith.constant 0 : i32
    %c0_i32_0 = arith.constant 0 : i32
    return %arg0, %c0_i32 : i32, i32
  }
  func.func @transform_1(%arg0: i32) -> (i32, i32) {
    %c0_i32 = arith.constant 0 : i32
    %c0_i32_0 = arith.constant 0 : i32
    %c0_i32_1 = arith.constant 0 : i32
    return %c0_i32, %c0_i32_0 : i32, i32
  }
  func.func @transform_2(%arg0: i32) -> (i32, i32) {
    %c0_i32 = arith.constant 0 : i32
    %c0_i32_0 = arith.constant 0 : i32
    %c0_i32_1 = arith.constant 0 : i32
    return %c0_i32, %c0_i32_0 : i32, i32
  }
  func.func @transform_3(%arg0: i32) -> (i32, i32) {
    %c0_i32 = arith.constant 0 : i32
    %c0_i32_0 = arith.constant 0 : i32
    %c0_i32_1 = arith.constant 0 : i32
    return %c0_i32, %c0_i32_0 : i32, i32
  }
  func.func @transform_4(%arg0: i32) -> (i32, i32) {
    %c0_i32 = arith.constant 0 : i32
    %c0_i32_0 = arith.constant 0 : i32
    %c0_i32_1 = arith.constant 0 : i32
    return %c0_i32, %c0_i32_0 : i32, i32
  }
  func.func @transform_5(%arg0: i32) -> (i32, i32) {
    %c0_i32 = arith.constant 0 : i32
    %c0_i32_0 = arith.constant 0 : i32
    return %arg0, %c0_i32 : i32, i32
  }
}

</mosaic_0001>

<llo_original>
// kernel: tpu_custom_call.1
$region0: #{tpu_custom_call.1}
  #allocation0 [shape = 'u32[]', space=smem, size = 0x4, offset = 0x4, fixed_abs, tag = 'smem constant byte address 0x4 - core index']
  #allocation1 [shape = 'u32[72,128]{1,0:T(1,128)}', space=vmem, size = 0x9000, scoped, tag = 'internal scratch']
  %s0 = inlined_call_operand.hbm [shape: bf16[16,128], index: 0, kind: input, shape index: {}]
  %s1 = inlined_call_operand.hbm [shape: bf16[128,128], index: 1, kind: input, shape index: {}]
  %s2 = inlined_call_operand.vmem [shape: f32[1,128], index: 2, kind: input, shape index: {}]
  %s3 = inlined_call_operand.hbm [shape: bf16[128,128], index: 3, kind: input, shape index: {}]
  %s4 = inlined_call_operand.vmem [shape: f32[1,128], index: 4, kind: input, shape index: {}]
  %s5 = inlined_call_operand.hbm [shape: f32[16,128], index: 5, kind: output, shape index: {}]
  %s6 = sld [smem:[#allocation0]]
  $region42: #{tpu_custom_call.1} parent=0
    _
  %s8 = ssub.s32 1, %s6
  %s9 = scalar_select 0, %s8, %s6
  $region1: #{tpu_custom_call.1} parent=0
    #allocation2 [shape = 'u8[4096]{0}', space=vmem, size = 0x1000, scoped, tag = 'input window, operand 0, single buffered']
    #allocation3 [shape = 's32[1]{0}', space=sflag, size = 0x4, scoped, tag = 'scoped memory for tpu_custom_call.1']
    #allocation4 [shape = 's32[1]{0}', space=sflag, size = 0x4, scoped, tag = 'scoped memory for tpu_custom_call.1']
    #allocation5 [shape = 'u8[32768]{0}', space=vmem, size = 0x8000, scoped, tag = 'input window, operand 1, single buffered']
    #allocation6 [shape = 's32[1]{0}', space=sflag, size = 0x4, scoped, tag = 'scoped memory for tpu_custom_call.1']
    #allocation7 [shape = 'u8[32768]{0}', space=vmem, size = 0x8000, scoped, tag = 'input window, operand 3, single buffered']
    #allocation8 [shape = 'u8[8192]{0}', space=vmem, size = 0x2000, scoped, tag = 'output window, operand 0, single buffered']
    %10 = vsyncpa [#allocation3], 0
    %11 = vsyncpa [#allocation6], 0
    %12 = vsyncpa [#allocation4], 0
    // Predicated region
    $region2: #{tpu_custom_call.1} parent=1 // pred_check
      _
    $region3: #{tpu_custom_call.1} parent=1 // pred_check_branch
      %14 = sbr.rel (0) target = $region5
    $region4: #{tpu_custom_call.1} parent=1 // pred_region
      %16 = vsyncadd [#allocation3], 0
      %s17 = sshll.u32 %s0, 4
      %s18 = int_to_ptr.hbm [resolvable:$true] %s17
      %s19 = sshll.u32 [#allocation2], 4
      %s20 = int_to_ptr.vmem [resolvable:$true] %s19
      %25 = dma.hbm_to_vmem [thread:$0]  %s18, 128, %s20, [#allocation3], 64, 64, 4
    $region5: #{tpu_custom_call.1} parent=1 // pred_fallthru
      _
    // Predicated region
    $region6: #{tpu_custom_call.1} parent=1 // pred_check
      _
    $region7: #{tpu_custom_call.1} parent=1 // pred_check_branch
      %27 = sbr.rel (0) target = $region9
    $region8: #{tpu_custom_call.1} parent=1 // pred_region
      %29 = vsyncadd [#allocation6], 0
      %s30 = sshll.u32 %s1, 4
      %s31 = int_to_ptr.hbm [resolvable:$true] %s30
      %s32 = sshll.u32 [#allocation5], 4
      %s33 = int_to_ptr.vmem [resolvable:$true] %s32
      %38 = dma.hbm_to_vmem [thread:$0]  %s31, 1024, %s33, [#allocation6], 64, 64, 4
    $region9: #{tpu_custom_call.1} parent=1 // pred_fallthru
      _
    // Predicated region
    $region10: #{tpu_custom_call.1} parent=1 // pred_check
      _
    $region11: #{tpu_custom_call.1} parent=1 // pred_check_branch
      %40 = sbr.rel (0) target = $region13
    $region12: #{tpu_custom_call.1} parent=1 // pred_region
      _
    $region13: #{tpu_custom_call.1} parent=1 // pred_fallthru
      _
    // Predicated region
    $region14: #{tpu_custom_call.1} parent=1 // pred_check
      _
    $region15: #{tpu_custom_call.1} parent=1 // pred_check_branch
      %42 = sbr.rel (0) target = $region17
    $region16: #{tpu_custom_call.1} parent=1 // pred_region
      %44 = vsyncadd [#allocation6], 0
      %s45 = sshll.u32 %s3, 4
      %s46 = int_to_ptr.hbm [resolvable:$true] %s45
      %s47 = sshll.u32 [#allocation7], 4
      %s48 = int_to_ptr.vmem [resolvable:$true] %s47
      %53 = dma.hbm_to_vmem [thread:$0]  %s46, 1024, %s48, [#allocation6], 64, 64, 4
    $region17: #{tpu_custom_call.1} parent=1 // pred_fallthru
      _
    // Predicated region
    $region18: #{tpu_custom_call.1} parent=1 // pred_check
      _
    $region19: #{tpu_custom_call.1} parent=1 // pred_check_branch
      %55 = sbr.rel (0) target = $region21
    $region20: #{tpu_custom_call.1} parent=1 // pred_region
      _
    $region21: #{tpu_custom_call.1} parent=1 // pred_fallthru
      _
    // Predicated region
    $region22: #{tpu_custom_call.1} parent=1 // pred_check
      _
    $region23: #{tpu_custom_call.1} parent=1 // pred_check_branch
      %57 = sbr.rel (0) target = $region25
    $region24: #{tpu_custom_call.1} parent=1 // pred_region
      %59 = dma.done [#allocation3], 128
    $region25: #{tpu_custom_call.1} parent=1 // pred_fallthru
      _
    // Predicated region
    $region26: #{tpu_custom_call.1} parent=1 // pred_check
      _
    $region27: #{tpu_custom_call.1} parent=1 // pred_check_branch
      %61 = sbr.rel (0) target = $region29
    $region28: #{tpu_custom_call.1} parent=1 // pred_region
      %63 = dma.done [#allocation6], 1024
    $region29: #{tpu_custom_call.1} parent=1 // pred_fallthru
      _
    // Predicated region
    $region30: #{tpu_custom_call.1} parent=1 // pred_check
      _
    $region31: #{tpu_custom_call.1} parent=1 // pred_check_branch
      %65 = sbr.rel (0) target = $region33
    $region32: #{tpu_custom_call.1} parent=1 // pred_region
      %67 = dma.done [#allocation6], 1024
    $region33: #{tpu_custom_call.1} parent=1 // pred_fallthru
      _
    %v68 = vld [vmem:[#allocation2] sm:$0xf]
    %v69 = vld [vmem:[#allocation2 + $0x4] sm:$0xf]
    %v70 = vld [vmem:[#allocation5] sm:$0xf]
    %v71 = vld [vmem:[#allocation5 + $0x4] sm:$0xf]
    %v72 = vld [vmem:[#allocation5 + $0x8] sm:$0xf]
    %v73 = vld [vmem:[#allocation5 + $0xc] sm:$0xf]
    %v74 = vld [vmem:[#allocation5 + $0x10] sm:$0xf]
    %v75 = vld [vmem:[#allocation5 + $0x14] sm:$0xf]
    %v76 = vld [vmem:[#allocation5 + $0x18] sm:$0xf]
    %v77 = vld [vmem:[#allocation5 + $0x1c] sm:$0xf]
    %v78 = vld [vmem:[#allocation5 + $0x20] sm:$0xf]
    %v79 = vld [vmem:[#allocation5 + $0x24] sm:$0xf]
    %v80 = vld [vmem:[#allocation5 + $0x28] sm:$0xf]
    %v81 = vld [vmem:[#allocation5 + $0x2c] sm:$0xf]
    %v82 = vld [vmem:[#allocation5 + $0x30] sm:$0xf]
    %v83 = vld [vmem:[#allocation5 + $0x34] sm:$0xf]
    %v84 = vld [vmem:[#allocation5 + $0x38] sm:$0xf]
    %v85 = vld [vmem:[#allocation5 + $0x3c] sm:$0xf]
    %v86 = vld [vmem:[%s2] sm:$0x1]
    %v88 = vperm.slane %v86, 0
    %v92 = vunpack.c.l.b16 %v68
    %v93 = vunpack.c.l.b16 %v69
    %v94 = vpack.c.b16 %v93, %v92
    %v112 = vunpack.c.l.b16 %v70
    %v113 = vunpack.c.l.b16 %v71
    %v114 = vunpack.c.l.b16 %v72
    %v115 = vunpack.c.l.b16 %v73
    %v116 = vunpack.c.l.b16 %v74
    %v117 = vunpack.c.l.b16 %v75
    %v118 = vunpack.c.l.b16 %v76
    %v119 = vunpack.c.l.b16 %v77
    %v120 = vunpack.c.l.b16 %v78
    %v121 = vunpack.c.l.b16 %v79
    %v122 = vunpack.c.l.b16 %v80
    %v123 = vunpack.c.l.b16 %v81
    %v124 = vunpack.c.l.b16 %v82
    %v125 = vunpack.c.l.b16 %v83
    %v126 = vunpack.c.l.b16 %v84
    %v127 = vunpack.c.l.b16 %v85
    %v128 = vpack.c.b16 %v113, %v112
    %v129 = vpack.c.b16 %v115, %v114
    %v130 = vpack.c.b16 %v117, %v116
    %v131 = vpack.c.b16 %v119, %v118
    %v132 = vpack.c.b16 %v121, %v120
    %v133 = vpack.c.b16 %v123, %v122
    %v134 = vpack.c.b16 %v125, %v124
    %v135 = vpack.c.b16 %v127, %v126
    %144 = vmatpush.bf16.msra.mxu0 %v135
    %145 = vmatpush.bf16.msra.mxu0 %v134
    %146 = vmatpush.bf16.msra.mxu0 %v133
    %147 = vmatpush.bf16.msra.mxu0 %v132
    %148 = vmatpush.bf16.msra.mxu0 %v131
    %149 = vmatpush.bf16.msra.mxu0 %v130
    %150 = vmatpush.bf16.msra.mxu0 %v129
    %151 = vmatpush.bf16.msra.mxu0 %v128
    %152 = vmatmul.bf16.gmra.mxu0 %v94
    %v153 = vpop.f32.mrf.mxu0
    %v154 = vadd.f32 %v88, %v153
    %v155 = vpop.f32.mrf.mxu0
    %v156 = vadd.f32 %v88, %v155
    %157 = vdwg.mxu0
    %v158 = vmax.f32 %v154, 0.0
    %v159 = vmax.f32 %v156, 0.0
    %v160 = vpack.c.bf16 %v159, %v158
    %v161 = vld [vmem:[#allocation7] sm:$0xf]
    %v162 = vld [vmem:[#allocation7 + $0x4] sm:$0xf]
    %v163 = vld [vmem:[#allocation7 + $0x8] sm:$0xf]
    %v164 = vld [vmem:[#allocation7 + $0xc] sm:$0xf]
    %v165 = vld [vmem:[#allocation7 + $0x10] sm:$0xf]
    %v166 = vld [vmem:[#allocation7 + $0x14] sm:$0xf]
    %v167 = vld [vmem:[#allocation7 + $0x18] sm:$0xf]
    %v168 = vld [vmem:[#allocation7 + $0x1c] sm:$0xf]
    %v169 = vld [vmem:[#allocation7 + $0x20] sm:$0xf]
    %v170 = vld [vmem:[#allocation7 + $0x24] sm:$0xf]
    %v171 = vld [vmem:[#allocation7 + $0x28] sm:$0xf]
    %v172 = vld [vmem:[#allocation7 + $0x2c] sm:$0xf]
    %v173 = vld [vmem:[#allocation7 + $0x30] sm:$0xf]
    %v174 = vld [vmem:[#allocation7 + $0x34] sm:$0xf]
    %v175 = vld [vmem:[#allocation7 + $0x38] sm:$0xf]
    %v176 = vld [vmem:[#allocation7 + $0x3c] sm:$0xf]
    %v177 = vld [vmem:[%s4] sm:$0x1]
    %v179 = vperm.slane %v177, 0
    %v197 = vunpack.c.l.b16 %v161
    %v198 = vunpack.c.l.b16 %v162
    %v199 = vunpack.c.l.b16 %v163
    %v200 = vunpack.c.l.b16 %v164
    %v201 = vunpack.c.l.b16 %v165
    %v202 = vunpack.c.l.b16 %v166
    %v203 = vunpack.c.l.b16 %v167
    %v204 = vunpack.c.l.b16 %v168
    %v205 = vunpack.c.l.b16 %v169
    %v206 = vunpack.c.l.b16 %v170
    %v207 = vunpack.c.l.b16 %v171
    %v208 = vunpack.c.l.b16 %v172
    %v209 = vunpack.c.l.b16 %v173
    %v210 = vunpack.c.l.b16 %v174
    %v211 = vunpack.c.l.b16 %v175
    %v212 = vunpack.c.l.b16 %v176
    %v213 = vpack.c.b16 %v198, %v197
    %v214 = vpack.c.b16 %v200, %v199
    %v215 = vpack.c.b16 %v202, %v201
    %v216 = vpack.c.b16 %v204, %v203
    %v217 = vpack.c.b16 %v206, %v205
    %v218 = vpack.c.b16 %v208, %v207
    %v219 = vpack.c.b16 %v210, %v209
    %v220 = vpack.c.b16 %v212, %v211
    %229 = vmatpush.bf16.msra.mxu0 %v220
    %230 = vmatpush.bf16.msra.mxu0 %v219
    %231 = vmatpush.bf16.msra.mxu0 %v218
    %232 = vmatpush.bf16.msra.mxu0 %v217
    %233 = vmatpush.bf16.msra.mxu0 %v216
    %234 = vmatpush.bf16.msra.mxu0 %v215
    %235 = vmatpush.bf16.msra.mxu0 %v214
    %236 = vmatpush.bf16.msra.mxu0 %v213
    %237 = vmatmul.bf16.gmra.mxu0 %v160
    %v238 = vpop.f32.mrf.mxu0
    %v239 = vadd.f32 %v179, %v238
    %v240 = vpop.f32.mrf.mxu0
    %v241 = vadd.f32 %v179, %v240
    %242 = vdwg.mxu0
    %243 = vst [vmem:[#allocation8] sm:$0xff] %v239
    %244 = vst [vmem:[#allocation8 + $0x8] sm:$0xff] %v241
    // Predicated region
    $region34: #{tpu_custom_call.1} parent=1 // pred_check
      _
    $region35: #{tpu_custom_call.1} parent=1 // pred_check_branch
      %246 = sbr.rel (0) target = $region37
    $region36: #{tpu_custom_call.1} parent=1 // pred_region
      %248 = vsyncadd [#allocation4], 0
      %s249 = sshll.u32 [#allocation8], 4
      %s250 = int_to_ptr.vmem [resolvable:$true] %s249
      %s251 = sshll.u32 %s5, 4
      %s252 = int_to_ptr.hbm [resolvable:$true] %s251
      %257 = dma.vmem_to_hbm [thread:$0]  %s250, 256, %s252, [#allocation4], 128, 128, 8
    $region37: #{tpu_custom_call.1} parent=1 // pred_fallthru
      _
    // Predicated region
    $region38: #{tpu_custom_call.1} parent=1 // pred_check
      _
    $region39: #{tpu_custom_call.1} parent=1 // pred_check_branch
      %259 = sbr.rel (0) target = $region41
    $region40: #{tpu_custom_call.1} parent=1 // pred_region
      %261 = dma.done [#allocation4], 256
    $region41: #{tpu_custom_call.1} parent=1 // pred_fallthru
      _
    %262 = vsyncpa [#allocation3], 1
    %263 = vsyncpa [#allocation6], 1
    %264 = vsyncpa [#allocation4], 1

</llo_original>
